<compile_context>
chip_gen: v6e
topology: v6e:2x2x1
jax: 0.10.0
libtpu: 0.0.40
codegen_flags: <defaults>
</compile_context>

<pallas_src>
import functools

import jax
import jax.numpy as jnp
from jax.experimental import pallas as pl
from jax.experimental.pallas import tpu as pltpu


def _make_mdl_kernel(n_layers, activation):
    """Kernel: refs = (x, w0, b0, w1, b1, ..., out)."""

    def kernel(*refs):
        x_ref = refs[0]
        out_ref = refs[-1]
        h = x_ref[...].astype(jnp.float32)
        for i in range(n_layers):
            w_ref = refs[1 + 2 * i]
            b_ref = refs[2 + 2 * i]
            # Linear: one full-lane MXU matmul per layer, f32 accumulation.
            h = jnp.dot(h, w_ref[...], preferred_element_type=jnp.float32)
            h = h + b_ref[...]
            # TODO(synk): dropout_rate=0.0 -> identity; nonzero rate would need
            # pltpu.prng_seed / pltpu.prng_random_bits, not emitted here.
            if activation is not None:
                h = activation(h)
        out_ref[...] = h.astype(out_ref.dtype)

    return kernel


def multi_dense_layer(inputs, weights, biases, *, activation=jnp.tanh,
                      dropout_rate=0.0, block_rows=512):
    """Pallas implementation of MultiDenseLayer.forward.

    inputs:  (..., F_in) float32 (arbitrary leading dims, like nn.Linear)
    weights: list of (F_i, F_{i+1}) arrays (pre-transposed vs torch's (out,in))
    biases:  list of (F_{i+1},) arrays
    returns: (..., F_last)
    """
    assert dropout_rate == 0.0, "only dropout_rate=0.0 (identity) supported"
    n_layers = len(weights)
    assert len(biases) == n_layers

    lead_shape = inputs.shape[:-1]
    f_in = inputs.shape[-1]
    f_out = weights[-1].shape[-1]

    # Flatten leading dims to rows -> one big (M, F) matmul chain.
    m = 1
    for d in lead_shape:
        m *= d
    x2d = inputs.reshape(m, f_in)

    # Row tiling: single step when everything fits (the common / demo case);
    # only tile when M is large and divides cleanly (tile rows % 8 == 0).
    if m > block_rows and m % block_rows == 0:
        tm = block_rows
    else:
        tm = m
    grid = (m // tm,)

    # 2-D biases so bias blocks are plain (1, F) VMEM tiles.
    biases_2d = [b.reshape(1, -1) for b in biases]

    # in_specs: x is tiled over rows; weights/biases are whole-array resident.
    in_specs = [pl.BlockSpec((tm, f_in), lambda i: (i, 0))]
    for w, b in zip(weights, biases_2d):
        in_specs.append(pl.BlockSpec(w.shape, lambda i: (0, 0)))
        in_specs.append(pl.BlockSpec(b.shape, lambda i: (0, 0)))
    out_specs = pl.BlockSpec((tm, f_out), lambda i: (i, 0))

    # Advisory cost estimate for XLA's scheduler.
    dims = [f_in] + [w.shape[-1] for w in weights]
    flops = 2 * m * sum(dims[i] * dims[i + 1] for i in range(n_layers))
    transcendentals = (m * sum(dims[1:])) if activation is not None else 0
    bytes_accessed = 4 * (m * f_in + m * f_out
                          + sum(w.size for w in weights)
                          + sum(b.size for b in biases))
    cost = pl.CostEstimate(flops=flops, transcendentals=transcendentals,
                           bytes_accessed=bytes_accessed)

    kernel = _make_mdl_kernel(n_layers, activation)

    args = [x2d]
    for w, b in zip(weights, biases_2d):
        args.append(w)
        args.append(b)

    out2d = pl.pallas_call(
        kernel,
        out_shape=jax.ShapeDtypeStruct((m, f_out), inputs.dtype),
        grid_spec=pltpu.PrefetchScalarGridSpec(
            num_scalar_prefetch=0,
            grid=grid,
            in_specs=in_specs,
            out_specs=out_specs,
        ),
        compiler_params=pltpu.CompilerParams(
            # Row axis is independent -> shards across v7x's two TensorCores
            # when there is more than one grid step.
            dimension_semantics=("parallel",)),
        cost_estimate=cost,
    )(*args)

    return out2d.reshape(*lead_shape, f_out)


def _reference(inputs, weights, biases, activation=jnp.tanh):
    h = inputs
    for w, b in zip(weights, biases):
        h = h @ w + b
        if activation is not None:
            h = activation(h)
    return h


if __name__ == "__main__":
    # Small shapes consistent with the module:
    #   batch=2, seq=8 leading dims, in_features=32, linear_units=[128, 256].
    B, S, F_IN = 2, 8, 32
    LINEAR_UNITS = [128, 256]

    key = jax.random.PRNGKey(0)
    keys = jax.random.split(key, 1 + 2 * len(LINEAR_UNITS))

    inputs = jax.random.normal(keys[0], (B, S, F_IN), dtype=jnp.float32)

    dims = [F_IN] + LINEAR_UNITS
    weights, biases = [], []
    for i, (c0, c1) in enumerate(zip(dims[:-1], dims[1:])):
        scale = 1.0 / jnp.sqrt(c0)
        # Pre-transposed to (in, out) so forward is x @ W + b.
        weights.append(scale * jax.random.normal(keys[1 + 2 * i], (c0, c1),
                                                 dtype=jnp.float32))
        biases.append(scale * jax.random.normal(keys[2 + 2 * i], (c1,),
                                                dtype=jnp.float32))

    out = multi_dense_layer(inputs, weights, biases,
                            activation=jnp.tanh, dropout_rate=0.0)
    out = jax.block_until_ready(out)

    ref = _reference(inputs, weights, biases, activation=jnp.tanh)
    assert out.shape == (B, S, LINEAR_UNITS[-1])
    assert jnp.allclose(out, ref, atol=1e-5, rtol=1e-5), "mismatch vs reference"

    print("KERNEL_OK")
</pallas_src>

<mosaic_0001>
module attributes {stable_mosaic.version = 11 : i64} {
  func.func @kernel(%arg0: i32, %arg1: memref<16x32xf32, #tpu.memory_space<vmem>>, %arg2: memref<32x128xf32, #tpu.memory_space<vmem>>, %arg3: memref<1x128xf32, #tpu.memory_space<vmem>>, %arg4: memref<128x256xf32, #tpu.memory_space<vmem>>, %arg5: memref<1x256xf32, #tpu.memory_space<vmem>>, %arg6: memref<16x256xf32, #tpu.memory_space<vmem>>) attributes {dimension_semantics = [#tpu.dimension_semantics<parallel>], iteration_bounds = array<i64: 1>, scalar_prefetch = 0 : i64, scratch_operands = 0 : i64, tpu.core_type = #tpu.core_type<tc>, window_params = [{transform_indices = @transform_0, window_bounds = array<i64: 16, 32>}, {pipeline_mode = #tpu.pipeline_mode<synchronous>, transform_indices = @transform_1, window_bounds = array<i64: 32, 128>}, {pipeline_mode = #tpu.pipeline_mode<synchronous>, transform_indices = @transform_2, window_bounds = array<i64: 1, 128>}, {pipeline_mode = #tpu.pipeline_mode<synchronous>, transform_indices = @transform_3, window_bounds = array<i64: 128, 256>}, {pipeline_mode = #tpu.pipeline_mode<synchronous>, transform_indices = @transform_4, window_bounds = array<i64: 1, 256>}, {transform_indices = @transform_5, window_bounds = array<i64: 16, 256>}]} {
    %c0 = arith.constant 0 : index
    %c0_0 = arith.constant 0 : index
    %0 = vector.load %arg1[%c0, %c0_0] : memref<16x32xf32, #tpu.memory_space<vmem>>, vector<16x32xf32>
    %c0_1 = arith.constant 0 : index
    %c0_2 = arith.constant 0 : index
    %1 = vector.load %arg2[%c0_1, %c0_2] : memref<32x128xf32, #tpu.memory_space<vmem>>, vector<32x128xf32>
    %cst = arith.constant dense<0.000000e+00> : vector<16x128xf32>
    %2 = tpu.matmul %0, %1, %cst {dimension_numbers = #tpu.dot_dimension_numbers<[1], [0], [0], [1], [0, 0, 1, 1], [], []>} : vector<16x32xf32>, vector<32x128xf32>, vector<16x128xf32> -> vector<16x128xf32>
    %c0_3 = arith.constant 0 : index
    %c0_4 = arith.constant 0 : index
    %3 = vector.load %arg3[%c0_3, %c0_4] : memref<1x128xf32, #tpu.memory_space<vmem>>, vector<1x128xf32>
    %4 = vector.broadcast %3 : vector<1x128xf32> to vector<16x128xf32>
    %5 = arith.addf %2, %4 : vector<16x128xf32>
    %6 = math.tanh %5 : vector<16x128xf32>
    %c0_5 = arith.constant 0 : index
    %c0_6 = arith.constant 0 : index
    %7 = vector.load %arg4[%c0_5, %c0_6] : memref<128x256xf32, #tpu.memory_space<vmem>>, vector<128x256xf32>
    %cst_7 = arith.constant dense<0.000000e+00> : vector<16x256xf32>
    %8 = tpu.matmul %6, %7, %cst_7 {dimension_numbers = #tpu.dot_dimension_numbers<[1], [0], [0], [1], [0, 0, 1, 1], [], []>} : vector<16x128xf32>, vector<128x256xf32>, vector<16x256xf32> -> vector<16x256xf32>
    %c0_8 = arith.constant 0 : index
    %c0_9 = arith.constant 0 : index
    %9 = vector.load %arg5[%c0_8, %c0_9] : memref<1x256xf32, #tpu.memory_space<vmem>>, vector<1x256xf32>
    %10 = vector.broadcast %9 : vector<1x256xf32> to vector<16x256xf32>
    %11 = arith.addf %8, %10 : vector<16x256xf32>
    %12 = math.tanh %11 : vector<16x256xf32>
    %c0_10 = arith.constant 0 : index
    %c0_11 = arith.constant 0 : index
    %13 = vector.load %arg6[%c0_10, %c0_11] : memref<16x256xf32, #tpu.memory_space<vmem>>, vector<16x256xf32>
    tpu.vector_store %arg6[%c0_10, %c0_11], %12 {strides = array<i32>} : memref<16x256xf32, #tpu.memory_space<vmem>>, vector<16x256xf32>,
    return
  }
  func.func @transform_0(%arg0: i32) -> (i32, i32) {
    %c0_i32 = arith.constant 0 : i32
    %c0_i32_0 = arith.constant 0 : i32
    return %arg0, %c0_i32 : i32, i32
  }
  func.func @transform_1(%arg0: i32) -> (i32, i32) {
    %c0_i32 = arith.constant 0 : i32
    %c0_i32_0 = arith.constant 0 : i32
    %c0_i32_1 = arith.constant 0 : i32
    return %c0_i32, %c0_i32_0 : i32, i32
  }
  func.func @transform_2(%arg0: i32) -> (i32, i32) {
    %c0_i32 = arith.constant 0 : i32
    %c0_i32_0 = arith.constant 0 : i32
    %c0_i32_1 = arith.constant 0 : i32
    return %c0_i32, %c0_i32_0 : i32, i32
  }
  func.func @transform_3(%arg0: i32) -> (i32, i32) {
    %c0_i32 = arith.constant 0 : i32
    %c0_i32_0 = arith.constant 0 : i32
    %c0_i32_1 = arith.constant 0 : i32
    return %c0_i32, %c0_i32_0 : i32, i32
  }
  func.func @transform_4(%arg0: i32) -> (i32, i32) {
    %c0_i32 = arith.constant 0 : i32
    %c0_i32_0 = arith.constant 0 : i32
    %c0_i32_1 = arith.constant 0 : i32
    return %c0_i32, %c0_i32_0 : i32, i32
  }
  func.func @transform_5(%arg0: i32) -> (i32, i32) {
    %c0_i32 = arith.constant 0 : i32
    %c0_i32_0 = arith.constant 0 : i32
    return %arg0, %c0_i32 : i32, i32
  }
}

</mosaic_0001>

<llo_original>
// kernel: tpu_custom_call.1
$region0: #{tpu_custom_call.1}
  #allocation0 [shape = 'u32[]', space=smem, size = 0x4, offset = 0x4, fixed_abs, tag = 'smem constant byte address 0x4 - core index']
  #allocation1 [shape = 'u32[144,128]{1,0:T(1,128)}', space=vmem, size = 0x12000, scoped, tag = 'internal scratch']
  %s0 = inlined_call_operand.hbm [shape: f32[16,32], index: 0, kind: input, shape index: {}]
  %s1 = inlined_call_operand.hbm [shape: f32[32,128], index: 1, kind: input, shape index: {}]
  %s2 = inlined_call_operand.vmem [shape: f32[1,128], index: 2, kind: input, shape index: {}]
  %s3 = inlined_call_operand.hbm [shape: f32[128,256], index: 3, kind: input, shape index: {}]
  %s4 = inlined_call_operand.vmem [shape: f32[1,256], index: 4, kind: input, shape index: {}]
  %s5 = inlined_call_operand.hbm [shape: f32[16,256], index: 5, kind: output, shape index: {}]
  %s6 = sld [smem:[#allocation0]]
  $region42: #{tpu_custom_call.1} parent=0
    _
  %s8 = ssub.s32 1, %s6
  %s9 = scalar_select 0, %s8, %s6
  $region1: #{tpu_custom_call.1} parent=0
    #allocation2 [shape = 'u8[8192]{0}', space=vmem, size = 0x2000, scoped, tag = 'input window, operand 0, single buffered']
    #allocation3 [shape = 's32[1]{0}', space=sflag, size = 0x4, scoped, tag = 'scoped memory for tpu_custom_call.1']
    #allocation4 [shape = 's32[1]{0}', space=sflag, size = 0x4, scoped, tag = 'scoped memory for tpu_custom_call.1']
    #allocation5 [shape = 'u8[16384]{0}', space=vmem, size = 0x4000, scoped, tag = 'input window, operand 1, single buffered']
    #allocation6 [shape = 's32[1]{0}', space=sflag, size = 0x4, scoped, tag = 'scoped memory for tpu_custom_call.1']
    #allocation7 [shape = 'u8[131072]{0}', space=vmem, size = 0x20000, scoped, tag = 'input window, operand 3, single buffered']
    #allocation8 [shape = 'u8[16384]{0}', space=vmem, size = 0x4000, scoped, tag = 'output window, operand 0, single buffered']
    %10 = vsyncpa [#allocation3], 0
    %11 = vsyncpa [#allocation6], 0
    %12 = vsyncpa [#allocation4], 0
    // Predicated region
    $region2: #{tpu_custom_call.1} parent=1 // pred_check
      _
    $region3: #{tpu_custom_call.1} parent=1 // pred_check_branch
      %14 = sbr.rel (0) target = $region5
    $region4: #{tpu_custom_call.1} parent=1 // pred_region
      %s16 = ssub.s32 256, 256
      %17 = vsyncadd [#allocation3], %s16
      %s18 = sshll.u32 [#allocation2], 4
      %s19 = int_to_ptr.vmem [resolvable:$true] %s18
      %24 = dma.hbm_to_vmem [thread:$0]  %s0, 256, %s19, [#allocation3], 128, 128, 8
    $region5: #{tpu_custom_call.1} parent=1 // pred_fallthru
      _
    // Predicated region
    $region6: #{tpu_custom_call.1} parent=1 // pred_check
      _
    $region7: #{tpu_custom_call.1} parent=1 // pred_check_branch
      %26 = sbr.rel (0) target = $region9
    $region8: #{tpu_custom_call.1} parent=1 // pred_region
      %s28 = ssub.s32 512, 512
      %29 = vsyncadd [#allocation6], %s28
      %s30 = sshll.u32 [#allocation5], 4
      %s31 = int_to_ptr.vmem [resolvable:$true] %s30
      %36 = dma.hbm_to_vmem [thread:$0]  %s1, 512, %s31, [#allocation6], 128, 128, 8
    $region9: #{tpu_custom_call.1} parent=1 // pred_fallthru
      _
    // Predicated region
    $region10: #{tpu_custom_call.1} parent=1 // pred_check
      _
    $region11: #{tpu_custom_call.1} parent=1 // pred_check_branch
      %38 = sbr.rel (0) target = $region13
    $region12: #{tpu_custom_call.1} parent=1 // pred_region
      _
    $region13: #{tpu_custom_call.1} parent=1 // pred_fallthru
      _
    // Predicated region
    $region14: #{tpu_custom_call.1} parent=1 // pred_check
      _
    $region15: #{tpu_custom_call.1} parent=1 // pred_check_branch
      %40 = sbr.rel (0) target = $region17
    $region16: #{tpu_custom_call.1} parent=1 // pred_region
      %s42 = ssub.s32 4096, 4096
      %43 = vsyncadd [#allocation6], %s42
      %s44 = sshll.u32 [#allocation7], 4
      %s45 = int_to_ptr.vmem [resolvable:$true] %s44
      %50 = dma.hbm_to_vmem [thread:$0]  %s3, 4096, %s45, [#allocation6], 256, 256, 16
    $region17: #{tpu_custom_call.1} parent=1 // pred_fallthru
      _
    // Predicated region
    $region18: #{tpu_custom_call.1} parent=1 // pred_check
      _
    $region19: #{tpu_custom_call.1} parent=1 // pred_check_branch
      %52 = sbr.rel (0) target = $region21
    $region20: #{tpu_custom_call.1} parent=1 // pred_region
      _
    $region21: #{tpu_custom_call.1} parent=1 // pred_fallthru
      _
    // Predicated region
    $region22: #{tpu_custom_call.1} parent=1 // pred_check
      _
    $region23: #{tpu_custom_call.1} parent=1 // pred_check_branch
      %54 = sbr.rel (0) target = $region25
    $region24: #{tpu_custom_call.1} parent=1 // pred_region
      %55 = dma.done [#allocation3], 256
    $region25: #{tpu_custom_call.1} parent=1 // pred_fallthru
      _
    // Predicated region
    $region26: #{tpu_custom_call.1} parent=1 // pred_check
      _
    $region27: #{tpu_custom_call.1} parent=1 // pred_check_branch
      %57 = sbr.rel (0) target = $region29
    $region28: #{tpu_custom_call.1} parent=1 // pred_region
      %58 = dma.done [#allocation6], 512
    $region29: #{tpu_custom_call.1} parent=1 // pred_fallthru
      _
    // Predicated region
    $region30: #{tpu_custom_call.1} parent=1 // pred_check
      _
    $region31: #{tpu_custom_call.1} parent=1 // pred_check_branch
      %60 = sbr.rel (0) target = $region33
    $region32: #{tpu_custom_call.1} parent=1 // pred_region
      %61 = dma.done [#allocation6], 4096
    $region33: #{tpu_custom_call.1} parent=1 // pred_fallthru
      _
    %v62 = vld [vmem:[#allocation2] sm:$0xff]
    %v63 = vld [vmem:[#allocation2 + $0x8] sm:$0xff]
    %v64 = vld [vmem:[#allocation5] sm:$0xff]
    %v65 = vld [vmem:[#allocation5 + $0x8] sm:$0xff]
    %v66 = vld [vmem:[#allocation5 + $0x10] sm:$0xff]
    %v67 = vld [vmem:[#allocation5 + $0x18] sm:$0xff]
    %v68 = vld [vmem:[%s2] sm:$0x1]
    %v70 = vlaneseq
    %v71 = vshrl.u32 %v70, 7
    %v72 = vsub.s32 0, %v71
    %v73 = vrot.slane %v68, %v72
    %vm75 = vcmask 261120
    %v77 = vsel %vm75, %v62, 0
    %v80 = vsel %vm75, %v63, 0
    %82 = vmatprep.subr.mxu0 0.0
    %83 = vmatpush1.msra.mxu0 0.0
    %84 = vmatprep.subr.mxu0 0.0
    %85 = vmatpush1.msra.mxu0 0.0
    %86 = vmatprep.subr.mxu0 0.0
    %87 = vmatpush1.msra.mxu0 0.0
    %88 = vmatprep.subr.mxu0 0.0
    %89 = vmatpush1.msra.mxu0 0.0
    %90 = vmatprep.subr.mxu0 0.0
    %91 = vmatpush1.msra.mxu0 0.0
    %92 = vmatprep.subr.mxu0 0.0
    %93 = vmatpush1.msra.mxu0 0.0
    %94 = vmatprep.subr.mxu0 0.0
    %95 = vmatpush1.msra.mxu0 0.0
    %96 = vmatprep.subr.mxu0 0.0
    %97 = vmatpush1.msra.mxu0 0.0
    %98 = vmatprep.subr.mxu0 0.0
    %99 = vmatpush1.msra.mxu0 0.0
    %100 = vmatprep.subr.mxu0 0.0
    %101 = vmatpush1.msra.mxu0 0.0
    %102 = vmatprep.subr.mxu0 0.0
    %103 = vmatpush1.msra.mxu0 0.0
    %104 = vmatprep.subr.mxu0 0.0
    %105 = vmatpush1.msra.mxu0 0.0
    %106 = vmatprep.subr.mxu0 0.0
    %107 = vmatpush1.msra.mxu0 %v67
    %108 = vmatprep.subr.mxu0 0.0
    %109 = vmatpush1.msra.mxu0 %v66
    %110 = vmatprep.subr.mxu0 0.0
    %111 = vmatpush1.msra.mxu0 %v65
    %112 = vmatprep.subr.mxu0 0.0
    %113 = vmatpush1.msra.mxu0 %v64
    %114 = vmatprep.subr.mxu0 0.0
    %115 = vmatpush2.msra.mxu0 0.0
    %116 = vmatprep.subr.mxu0 0.0
    %117 = vmatpush2.msra.mxu0 0.0
    %118 = vmatprep.subr.mxu0 0.0
    %119 = vmatpush2.msra.mxu0 0.0
    %120 = vmatprep.subr.mxu0 0.0
    %121 = vmatpush2.msra.mxu0 0.0
    %122 = vmatprep.subr.mxu0 0.0
    %123 = vmatpush2.msra.mxu0 0.0
    %124 = vmatprep.subr.mxu0 0.0
    %125 = vmatpush2.msra.mxu0 0.0
    %126 = vmatprep.subr.mxu0 0.0
    %127 = vmatpush2.msra.mxu0 0.0
    %128 = vmatprep.subr.mxu0 0.0
    %129 = vmatpush2.msra.mxu0 0.0
    %130 = vmatprep.subr.mxu0 0.0
    %131 = vmatpush2.msra.mxu0 0.0
    %132 = vmatprep.subr.mxu0 0.0
    %133 = vmatpush2.msra.mxu0 0.0
    %134 = vmatprep.subr.mxu0 0.0
    %135 = vmatpush2.msra.mxu0 0.0
    %136 = vmatprep.subr.mxu0 0.0
    %137 = vmatpush2.msra.mxu0 0.0
    %138 = vmatprep.subr.mxu0 0.0
    %139 = vmatpush2.msra.mxu0 0.0
    %140 = vmatprep.subr.mxu0 0.0
    %141 = vmatpush2.msra.mxu0 0.0
    %142 = vmatprep.subr.mxu0 0.0
    %143 = vmatpush2.msra.mxu0 0.0
    %144 = vmatprep.subr.mxu0 0.0
    %145 = vmatpush2.msra.mxu0 0.0
    %146 = vmatprep.mubr.f32.mxu0 0.0
    %147 = vmatmul.mubr.f32.gmra.mxu0 %v77
    %v148 = vpop.f32.mrf.mxu0
    %v149 = vadd.f32 %v73, %v148
    %v150 = vpop.f32.mrf.mxu0
    %151 = vmatprep.mubr.f32.mxu0 0.0
    %152 = vmatmul.mubr.f32.gmra.mxu0 %v80
    %v153 = vpop.f32.mrf.mxu0
    %v154 = vadd.f32 %v73, %v153
    %v155 = vpop.f32.mrf.mxu0
    %156 = vdwg.mxu0
    %v157 = vtanh.pop %v149
    %v158 = vtanh.pop %v154
    %v159 = vld [vmem:[#allocation7] sm:$0xff]
    %v160 = vld [vmem:[#allocation7 + $0x8] sm:$0xff]
    %v161 = vld [vmem:[#allocation7 + $0x10] sm:$0xff]
    %v162 = vld [vmem:[#allocation7 + $0x18] sm:$0xff]
    %v163 = vld [vmem:[#allocation7 + $0x20] sm:$0xff]
    %v164 = vld [vmem:[#allocation7 + $0x28] sm:$0xff]
    %v165 = vld [vmem:[#allocation7 + $0x30] sm:$0xff]
    %v166 = vld [vmem:[#allocation7 + $0x38] sm:$0xff]
    %v167 = vld [vmem:[#allocation7 + $0x40] sm:$0xff]
    %v168 = vld [vmem:[#allocation7 + $0x48] sm:$0xff]
    %v169 = vld [vmem:[#allocation7 + $0x50] sm:$0xff]
    %v170 = vld [vmem:[#allocation7 + $0x58] sm:$0xff]
    %v171 = vld [vmem:[#allocation7 + $0x60] sm:$0xff]
    %v172 = vld [vmem:[#allocation7 + $0x68] sm:$0xff]
    %v173 = vld [vmem:[#allocation7 + $0x70] sm:$0xff]
    %v174 = vld [vmem:[#allocation7 + $0x78] sm:$0xff]
    %v175 = vld [vmem:[#allocation7 + $0x80] sm:$0xff]
    %v176 = vld [vmem:[#allocation7 + $0x88] sm:$0xff]
    %v177 = vld [vmem:[#allocation7 + $0x90] sm:$0xff]
    %v178 = vld [vmem:[#allocation7 + $0x98] sm:$0xff]
    %v179 = vld [vmem:[#allocation7 + $0xa0] sm:$0xff]
    %v180 = vld [vmem:[#allocation7 + $0xa8] sm:$0xff]
    %v181 = vld [vmem:[#allocation7 + $0xb0] sm:$0xff]
    %v182 = vld [vmem:[#allocation7 + $0xb8] sm:$0xff]
    %v183 = vld [vmem:[#allocation7 + $0xc0] sm:$0xff]
    %v184 = vld [vmem:[#allocation7 + $0xc8] sm:$0xff]
    %v185 = vld [vmem:[#allocation7 + $0xd0] sm:$0xff]
    %v186 = vld [vmem:[#allocation7 + $0xd8] sm:$0xff]
    %v187 = vld [vmem:[#allocation7 + $0xe0] sm:$0xff]
    %v188 = vld [vmem:[#allocation7 + $0xe8] sm:$0xff]
    %v189 = vld [vmem:[#allocation7 + $0xf0] sm:$0xff]
    %v190 = vld [vmem:[#allocation7 + $0xf8] sm:$0xff]
    %v191 = vld [vmem:[%s4] sm:$0x3]
    %v193 = vlaneseq
    %v194 = vshrl.u32 %v193, 7
    %v195 = vsub.s32 0, %v194
    %v196 = vrot.slane %v191, %v195
    %v197 = vlaneseq
    %v198 = vshrl.u32 %v197, 7
    %v199 = vsub.s32 1, %v198
    %v200 = vrot.slane %v191, %v199
    %203 = vmatprep.subr.mxu0 %v190
    %204 = vmatpush1.msra.mxu0 %v189
    %205 = vmatprep.subr.mxu0 %v188
    %206 = vmatpush1.msra.mxu0 %v187
    %207 = vmatprep.subr.mxu0 %v186
    %208 = vmatpush1.msra.mxu0 %v185
    %209 = vmatprep.subr.mxu0 %v184
    %210 = vmatpush1.msra.mxu0 %v183
    %211 = vmatprep.subr.mxu0 %v182
    %212 = vmatpush1.msra.mxu0 %v181
    %213 = vmatprep.subr.mxu0 %v180
    %214 = vmatpush1.msra.mxu0 %v179
    %215 = vmatprep.subr.mxu0 %v178
    %216 = vmatpush1.msra.mxu0 %v177
    %217 = vmatprep.subr.mxu0 %v176
    %218 = vmatpush1.msra.mxu0 %v175
    %219 = vmatprep.subr.mxu0 %v174
    %220 = vmatpush1.msra.mxu0 %v173
    %221 = vmatprep.subr.mxu0 %v172
    %222 = vmatpush1.msra.mxu0 %v171
    %223 = vmatprep.subr.mxu0 %v170
    %224 = vmatpush1.msra.mxu0 %v169
    %225 = vmatprep.subr.mxu0 %v168
    %226 = vmatpush1.msra.mxu0 %v167
    %227 = vmatprep.subr.mxu0 %v166
    %228 = vmatpush1.msra.mxu0 %v165
    %229 = vmatprep.subr.mxu0 %v164
    %230 = vmatpush1.msra.mxu0 %v163
    %231 = vmatprep.subr.mxu0 %v162
    %232 = vmatpush1.msra.mxu0 %v161
    %233 = vmatprep.subr.mxu0 %v160
    %234 = vmatpush1.msra.mxu0 %v159
    %235 = vmatprep.subr.mxu0 0.0
    %236 = vmatpush2.msra.mxu0 0.0
    %237 = vmatprep.subr.mxu0 0.0
    %238 = vmatpush2.msra.mxu0 0.0
    %239 = vmatprep.subr.mxu0 0.0
    %240 = vmatpush2.msra.mxu0 0.0
    %241 = vmatprep.subr.mxu0 0.0
    %242 = vmatpush2.msra.mxu0 0.0
    %243 = vmatprep.subr.mxu0 0.0
    %244 = vmatpush2.msra.mxu0 0.0
    %245 = vmatprep.subr.mxu0 0.0
    %246 = vmatpush2.msra.mxu0 0.0
    %247 = vmatprep.subr.mxu0 0.0
    %248 = vmatpush2.msra.mxu0 0.0
    %249 = vmatprep.subr.mxu0 0.0
    %250 = vmatpush2.msra.mxu0 0.0
    %251 = vmatprep.subr.mxu0 0.0
    %252 = vmatpush2.msra.mxu0 0.0
    %253 = vmatprep.subr.mxu0 0.0
    %254 = vmatpush2.msra.mxu0 0.0
    %255 = vmatprep.subr.mxu0 0.0
    %256 = vmatpush2.msra.mxu0 0.0
    %257 = vmatprep.subr.mxu0 0.0
    %258 = vmatpush2.msra.mxu0 0.0
    %259 = vmatprep.subr.mxu0 0.0
    %260 = vmatpush2.msra.mxu0 0.0
    %261 = vmatprep.subr.mxu0 0.0
    %262 = vmatpush2.msra.mxu0 0.0
    %263 = vmatprep.subr.mxu0 0.0
    %264 = vmatpush2.msra.mxu0 0.0
    %265 = vmatprep.subr.mxu0 0.0
    %266 = vmatpush2.msra.mxu0 0.0
    %267 = vmatprep.mubr.f32.mxu0 0.0
    %268 = vmatmul.mubr.f32.gmra.mxu0 %v157
    %v269 = vpop.f32.mrf.mxu0
    %v270 = vadd.f32 %v196, %v269
    %v271 = vpop.f32.mrf.mxu0
    %v272 = vadd.f32 %v200, %v271
    %273 = vmatprep.mubr.f32.mxu0 0.0
    %274 = vmatmul.mubr.f32.gmra.mxu0 %v158
    %v275 = vpop.f32.mrf.mxu0
    %v276 = vadd.f32 %v196, %v275
    %v277 = vpop.f32.mrf.mxu0
    %v278 = vadd.f32 %v200, %v277
    %279 = vdwg.mxu0
    %v280 = vtanh.pop %v270
    %v281 = vtanh.pop %v272
    %v282 = vtanh.pop %v276
    %v283 = vtanh.pop %v278
    %284 = vst [vmem:[#allocation8] sm:$0xff] %v280
    %285 = vst [vmem:[#allocation8 + $0x8] sm:$0xff] %v281
    %286 = vst [vmem:[#allocation8 + $0x10] sm:$0xff] %v282
    %287 = vst [vmem:[#allocation8 + $0x18] sm:$0xff] %v283
    // Predicated region
    $region34: #{tpu_custom_call.1} parent=1 // pred_check
      _
    $region35: #{tpu_custom_call.1} parent=1 // pred_check_branch
      %289 = sbr.rel (0) target = $region37
    $region36: #{tpu_custom_call.1} parent=1 // pred_region
      %s291 = ssub.s32 512, 512
      %292 = vsyncadd [#allocation4], %s291
      %s293 = sshll.u32 [#allocation8], 4
      %s294 = int_to_ptr.vmem [resolvable:$true] %s293
      %299 = dma.vmem_to_hbm [thread:$0]  %s294, 512, %s5, [#allocation4], 256, 256, 16
    $region37: #{tpu_custom_call.1} parent=1 // pred_fallthru
      _
    // Predicated region
    $region38: #{tpu_custom_call.1} parent=1 // pred_check
      _
    $region39: #{tpu_custom_call.1} parent=1 // pred_check_branch
      %301 = sbr.rel (0) target = $region41
    $region40: #{tpu_custom_call.1} parent=1 // pred_region
      %302 = dma.done [#allocation4], 512
    $region41: #{tpu_custom_call.1} parent=1 // pred_fallthru
      _
    %303 = vsyncpa [#allocation3], 1
    %304 = vsyncpa [#allocation6], 1
    %305 = vsyncpa [#allocation4], 1

</llo_original>
